<compile_context>
chip_gen: v7x
topology: tpu7x:2x2x1
jax: 0.10.0
libtpu: 0.0.40
codegen_flags: <defaults>
</compile_context>

<pallas_src>
import functools
import math

import jax
import jax.numpy as jnp
import numpy as np
from jax import lax
from jax.experimental import pallas as pl
from jax.experimental.pallas import tpu as pltpu

EPS = 1e-5


def _resblock_kernel(x_ref, w1_ref, w2_ref, p1_ref, p2_ref, avg_ref, out_ref, *, img_h):
    # x_ref   : (N*H, W*CP) f32   input, (W, CP) flattened into lanes (W*CP % 128 == 0)
    # w1_ref  : (3*W*CP, W*CP) bf16  conv1 band weights, 3 ky taps stacked along K
    # w2_ref  : (3*W*CP, W*CP) bf16  conv2 band weights
    # p1_ref  : (2, W*CP) f32     [gamma, beta] of BN1, tiled over W (zero on pad channels)
    # p2_ref  : (2, W*CP) f32     [gamma, beta] of BN2
    # avg_ref : (W*CP, W*CP) f32  per-channel averaging matrix (includes 1/(N*H*W))
    # out_ref : (N*H, W*CP) f32
    nrows, wc = x_ref.shape

    x = x_ref[...]          # reused as residual -> no second read / slice of the input
    avg = avg_ref[...]      # hoisted: loaded once, shared by both BNs

    # Per-image H-halo masks (row index within its image).  Zeroing the rolled rows that
    # would cross the H boundary (or the next image) reproduces zero padding along H.
    row = lax.broadcasted_iota(jnp.int32, (nrows, wc), 0)
    r = lax.rem(row, jnp.full_like(row, img_h))
    first_row = r == 0
    last_row = r == img_h - 1

    def shifted_lhs(z):
        # (nrows, wc) f32 -> (nrows, 3*wc) bf16: ky-shifted row slabs concatenated along
        # lanes, so each conv is a single fused K = 3*W*CP MXU matmul.
        km1 = jnp.where(first_row, 0.0, pltpu.roll(z, shift=1, axis=0))          # row r-1 (ky=0)
        kp1 = jnp.where(last_row, 0.0, pltpu.roll(z, shift=nrows - 1, axis=0))   # row r+1 (ky=2)
        return jnp.concatenate(
            [km1.astype(jnp.bfloat16), z.astype(jnp.bfloat16), kp1.astype(jnp.bfloat16)],
            axis=1)

    def batchnorm(z, p_ref):
        # Training-mode BN (biased variance).  Reduce over rows FIRST, then fold the
        # (1, W*CP) sums per channel with a tiny matmul against the averaging matrix.
        gamma = p_ref[0:1, :]
        beta = p_ref[1:2, :]
        s = jnp.sum(z, axis=0, keepdims=True)                                   # (1, W*CP)
        ss = jnp.sum(z * z, axis=0, keepdims=True)                              # (1, W*CP)
        mean = jnp.dot(s, avg, preferred_element_type=jnp.float32)              # per-channel mean, W-tiled
        msq = jnp.dot(ss, avg, preferred_element_type=jnp.float32)
        var = jnp.maximum(msq - mean * mean, 0.0)
        scale = lax.rsqrt(var + EPS) * gamma                                    # fused affine
        shift = beta - mean * scale
        return z * scale + shift

    # conv1 -> BN1 -> ReLU   (conv bias omitted: exact no-op under training-mode BN)
    z1 = jnp.dot(shifted_lhs(x), w1_ref[...], preferred_element_type=jnp.float32)
    y1 = jnp.maximum(batchnorm(z1, p1_ref), 0.0)

    # conv2 -> BN2
    z2 = jnp.dot(shifted_lhs(y1), w2_ref[...], preferred_element_type=jnp.float32)
    y2 = batchnorm(z2, p2_ref)

    # residual + final ReLU
    out_ref[...] = jnp.maximum(y2 + x, 0.0)


def _band_weights(w_oihw, width, cpad):
    """Zero-padded (CP, CP, 3, 3) conv weight -> (3*W*CP, W*CP) bf16 banded matrix.

    Row index = ky*W*CP + wq*CP + ci, col index = wo*CP + co, value w[co, ci, ky, kx]
    with kx = wq - wo + 1 (zero outside the band), so one matmul per conv implements all
    ky/kx taps plus zero padding along W."""
    cout, cin, kh, kw = w_oihw.shape
    assert kh == 3 and kw == 3 and cout == cpad and cin == cpad
    wt = jnp.transpose(w_oihw, (2, 3, 1, 0)).astype(jnp.float32)   # (ky, kx, Cin, Cout)
    sel = np.zeros((3, width, width), np.float32)                  # sel[kx, wq, wo]
    for kx in range(3):
        for wo in range(width):
            wq = wo + kx - 1
            if 0 <= wq < width:
                sel[kx, wq, wo] = 1.0
    m = jnp.einsum("xqw,yxio->yqiwo", jnp.asarray(sel), wt)        # (3, W, Cin, W, Cout)
    return m.reshape(3 * width * cpad, width * cpad).astype(jnp.bfloat16)


def _lane_params(gamma, beta, width, cpad):
    c = gamma.shape[0]
    g = jnp.zeros((cpad,), jnp.float32).at[:c].set(gamma.astype(jnp.float32))
    b = jnp.zeros((cpad,), jnp.float32).at[:c].set(beta.astype(jnp.float32))
    return jnp.stack([jnp.tile(g, width), jnp.tile(b, width)], axis=0)  # (2, W*CP)


@jax.jit
def resblock_forward(x_nchw, w1, b1, g1, be1, w2, b2, g2, be2):
    """x_nchw: (N, C, H, W); w*: (C, C, 3, 3); b*/g*/be*: (C,)."""
    del b1, b2  # conv biases cancel exactly under training-mode BatchNorm
    n, c, h, w = x_nchw.shape
    assert w1.shape == (c, c, 3, 3) and w2.shape == (c, c, 3, 3), "basic ResBlock needs Cin == Cout"

    # Pad C so that the flattened lane dim W*CP is a multiple of 128 (lane-dense).
    step = 128 // math.gcd(w, 128)
    cp = ((c + step - 1) // step) * step
    wc = w * cp

    # NCHW -> NHWC -> zero-pad channels -> flatten (W, CP) into the lane dim.  No H pad.
    x_nhwc = jnp.transpose(x_nchw, (0, 2, 3, 1)).astype(jnp.float32)
    x_in = jnp.pad(x_nhwc, ((0, 0), (0, 0), (0, 0), (0, cp - c))).reshape(n * h, wc)

    w1m = _band_weights(jnp.pad(w1, ((0, cp - c), (0, cp - c), (0, 0), (0, 0))), w, cp)
    w2m = _band_weights(jnp.pad(w2, ((0, cp - c), (0, cp - c), (0, 0), (0, 0))), w, cp)
    p1 = _lane_params(g1, be1, w, cp)
    p2 = _lane_params(g2, be2, w, cp)

    # Channel-averaging matrix: (row-sum of z) @ avg = per-channel mean, tiled over the W
    # lane groups; includes the 1/(N*H*W) factor.  Padded channels never mix with real ones.
    chan = np.arange(wc) % cp
    avg = jnp.asarray((chan[:, None] == chan[None, :]).astype(np.float32) / float(n * h * w))

    out = pl.pallas_call(
        functools.partial(_resblock_kernel, img_h=h),
        out_shape=jax.ShapeDtypeStruct((n * h, wc), jnp.float32),
        in_specs=[pl.BlockSpec(memory_space=pltpu.MemorySpace.VMEM)] * 6,
        out_specs=pl.BlockSpec(memory_space=pltpu.MemorySpace.VMEM),
        compiler_params=pltpu.CompilerParams(vmem_limit_bytes=32 * 1024 * 1024),
    )(x_in, w1m, w2m, p1, p2, avg)

    out_nhwc = out.reshape(n, h, w, cp)[:, :, :, :c]
    return jnp.transpose(out_nhwc, (0, 3, 1, 2))


# ----------------- pure-JAX reference (for correctness check) -----------------
def _conv2d_ref(x_nhwc, w, b):
    w_hwio = jnp.transpose(w, (2, 3, 1, 0))
    y = jax.lax.conv_general_dilated(
        x_nhwc, w_hwio, window_strides=(1, 1), padding=((1, 1), (1, 1)),
        dimension_numbers=("NHWC", "HWIO", "NHWC"))
    return y + b[None, None, None, :]


def _bn_ref(z, gamma, beta):
    mean = jnp.mean(z, axis=(0, 1, 2), keepdims=True)
    var = jnp.mean((z - mean) ** 2, axis=(0, 1, 2), keepdims=True)
    return (z - mean) / jnp.sqrt(var + EPS) * gamma + beta


def resblock_ref(x_nchw, w1, b1, g1, be1, w2, b2, g2, be2):
    x = jnp.transpose(x_nchw, (0, 2, 3, 1)).astype(jnp.float32)
    y = jnp.maximum(_bn_ref(_conv2d_ref(x, w1, b1), g1, be1), 0.0)   # conv1 + BN + ReLU
    y = _bn_ref(_conv2d_ref(y, w2, b2), g2, be2)                     # conv2 + BN
    y = jnp.maximum(y + x, 0.0)                                      # residual + ReLU
    return jnp.transpose(y, (0, 3, 1, 2))


if __name__ == "__main__":
    key = jax.random.PRNGKey(0)
    N, C, H, W = 2, 4, 16, 16
    ks = jax.random.split(key, 9)

    x = jax.random.normal(ks[0], (N, C, H, W), dtype=jnp.float32)
    bound = 1.0 / np.sqrt(C * 9)
    w1 = jax.random.uniform(ks[1], (C, C, 3, 3), minval=-bound, maxval=bound, dtype=jnp.float32)
    b1 = jax.random.uniform(ks[2], (C,), minval=-bound, maxval=bound, dtype=jnp.float32)
    w2 = jax.random.uniform(ks[3], (C, C, 3, 3), minval=-bound, maxval=bound, dtype=jnp.float32)
    b2 = jax.random.uniform(ks[4], (C,), minval=-bound, maxval=bound, dtype=jnp.float32)
    # BatchNorm affine params (randomized to exercise the gamma/beta path).
    g1 = 1.0 + 0.1 * jax.random.normal(ks[5], (C,), dtype=jnp.float32)
    be1 = 0.1 * jax.random.normal(ks[6], (C,), dtype=jnp.float32)
    g2 = 1.0 + 0.1 * jax.random.normal(ks[7], (C,), dtype=jnp.float32)
    be2 = 0.1 * jax.random.normal(ks[8], (C,), dtype=jnp.float32)

    out = jax.block_until_ready(resblock_forward(x, w1, b1, g1, be1, w2, b2, g2, be2))
    ref = jax.block_until_ready(resblock_ref(x, w1, b1, g1, be1, w2, b2, g2, be2))
    # Tolerance loosened vs. the pure-f32 version: the conv matmuls use bf16 MXU operands
    # (f32 accumulation); through two conv+BN stages that is ~1e-2-level absolute error.
    np.testing.assert_allclose(np.asarray(out), np.asarray(ref), rtol=3e-2, atol=3e-2)

    print("KERNEL_OK")
</pallas_src>

<mosaic_0001>
module attributes {stable_mosaic.version = 11 : i64} {
  func.func @_resblock_kernel(%arg0: memref<32x128xf32, #tpu.memory_space<vmem>>, %arg1: memref<384x128xbf16, #tpu.memory_space<vmem>>, %arg2: memref<384x128xbf16, #tpu.memory_space<vmem>>, %arg3: memref<2x128xf32, #tpu.memory_space<vmem>>, %arg4: memref<2x128xf32, #tpu.memory_space<vmem>>, %arg5: memref<128x128xf32, #tpu.memory_space<vmem>>, %arg6: memref<32x128xf32, #tpu.memory_space<vmem>>) attributes {dimension_semantics = [], scalar_prefetch = 0 : i64, scratch_operands = 0 : i64, tpu.core_type = #tpu.core_type<tc>} {
    %c0 = arith.constant 0 : index
    %c0_0 = arith.constant 0 : index
    %0 = vector.load %arg0[%c0, %c0_0] : memref<32x128xf32, #tpu.memory_space<vmem>>, vector<32x128xf32>
    %c0_1 = arith.constant 0 : index
    %c0_2 = arith.constant 0 : index
    %1 = vector.load %arg5[%c0_1, %c0_2] : memref<128x128xf32, #tpu.memory_space<vmem>>, vector<128x128xf32>
    %2 = tpu.iota {dimensions = array<i32: 0>} : vector<32x128xi32>
    %c16_i32 = arith.constant 16 : i32
    %3 = vector.broadcast %c16_i32 : i32 to vector<32x128xi32>
    %4 = arith.remsi %2, %3 : vector<32x128xi32>
    %c0_i32 = arith.constant 0 : i32
    %5 = vector.broadcast %c0_i32 : i32 to vector<32x128xi32>
    %6 = arith.cmpi eq, %4, %5 : vector<32x128xi32>
    %c15_i32 = arith.constant 15 : i32
    %7 = vector.broadcast %c15_i32 : i32 to vector<32x128xi32>
    %8 = arith.cmpi eq, %4, %7 : vector<32x128xi32>
    %c1_i32 = arith.constant 1 : i32
    %9 = tpu.dynamic_rotate %0 by %c1_i32 dim 0 : vector<32x128xf32>, i32 -> vector<32x128xf32>
    %cst = arith.constant 0.000000e+00 : f32
    %10 = vector.broadcast %cst : f32 to vector<32x128xf32>
    %11 = arith.select %6, %10, %9 : vector<32x128xi1>, vector<32x128xf32>
    %c31_i32 = arith.constant 31 : i32
    %12 = tpu.dynamic_rotate %0 by %c31_i32 dim 0 : vector<32x128xf32>, i32 -> vector<32x128xf32>
    %cst_3 = arith.constant 0.000000e+00 : f32
    %13 = vector.broadcast %cst_3 : f32 to vector<32x128xf32>
    %14 = arith.select %8, %13, %12 : vector<32x128xi1>, vector<32x128xf32>
    %15 = arith.truncf %11 : vector<32x128xf32> to vector<32x128xbf16>
    %16 = arith.truncf %0 : vector<32x128xf32> to vector<32x128xbf16>
    %17 = arith.truncf %14 : vector<32x128xf32> to vector<32x128xbf16>
    %18 = tpu.concatenate %15, %16, %17 in 1 : vector<32x128xbf16>, vector<32x128xbf16>, vector<32x128xbf16> -> vector<32x384xbf16>
    %c0_4 = arith.constant 0 : index
    %c0_5 = arith.constant 0 : index
    %19 = vector.load %arg1[%c0_4, %c0_5] : memref<384x128xbf16, #tpu.memory_space<vmem>>, vector<384x128xbf16>
    %cst_6 = arith.constant dense<0.000000e+00> : vector<32x128xf32>
    %20 = tpu.matmul %18, %19, %cst_6 {dimension_numbers = #tpu.dot_dimension_numbers<[1], [0], [0], [1], [0, 0, 1, 1], [], []>} : vector<32x384xbf16>, vector<384x128xbf16>, vector<32x128xf32> -> vector<32x128xf32>
    %c0_7 = arith.constant 0 : index
    %c0_8 = arith.constant 0 : index
    %21 = vector.load %arg3[%c0_7, %c0_8] : memref<2x128xf32, #tpu.memory_space<vmem>>, vector<1x128xf32>
    %c1 = arith.constant 1 : index
    %c0_9 = arith.constant 0 : index
    %22 = vector.load %arg3[%c1, %c0_9] : memref<2x128xf32, #tpu.memory_space<vmem>>, vector<1x128xf32>
    %cst_10 = arith.constant dense<0.000000e+00> : vector<128xf32>
    %23 = vector.multi_reduction <add>, %20, %cst_10 [0] : vector<32x128xf32> to vector<128xf32>
    %24 = vector.shape_cast %23 : vector<128xf32> to vector<1x128xf32>
    %25 = arith.mulf %20, %20 : vector<32x128xf32>
    %cst_11 = arith.constant dense<0.000000e+00> : vector<128xf32>
    %26 = vector.multi_reduction <add>, %25, %cst_11 [0] : vector<32x128xf32> to vector<128xf32>
    %27 = vector.shape_cast %26 : vector<128xf32> to vector<1x128xf32>
    %cst_12 = arith.constant dense<0.000000e+00> : vector<1x128xf32>
    %28 = tpu.matmul %24, %1, %cst_12 {dimension_numbers = #tpu.dot_dimension_numbers<[1], [0], [0], [1], [0, 0, 1, 1], [], []>} : vector<1x128xf32>, vector<128x128xf32>, vector<1x128xf32> -> vector<1x128xf32>
    %cst_13 = arith.constant dense<0.000000e+00> : vector<1x128xf32>
    %29 = tpu.matmul %27, %1, %cst_13 {dimension_numbers = #tpu.dot_dimension_numbers<[1], [0], [0], [1], [0, 0, 1, 1], [], []>} : vector<1x128xf32>, vector<128x128xf32>, vector<1x128xf32> -> vector<1x128xf32>
    %30 = arith.mulf %28, %28 : vector<1x128xf32>
    %31 = arith.subf %29, %30 : vector<1x128xf32>
    %cst_14 = arith.constant 0.000000e+00 : f32
    %32 = vector.broadcast %cst_14 : f32 to vector<1x128xf32>
    %33 = arith.maximumf %31, %32 : vector<1x128xf32>
    %cst_15 = arith.constant 9.99999974E-6 : f32
    %34 = vector.broadcast %cst_15 : f32 to vector<1x128xf32>
    %35 = arith.addf %33, %34 : vector<1x128xf32>
    %36 = math.rsqrt %35 : vector<1x128xf32>
    %37 = arith.mulf %36, %21 : vector<1x128xf32>
    %38 = arith.mulf %28, %37 : vector<1x128xf32>
    %39 = arith.subf %22, %38 : vector<1x128xf32>
    %40 = vector.broadcast %37 : vector<1x128xf32> to vector<32x128xf32>
    %41 = arith.mulf %20, %40 : vector<32x128xf32>
    %42 = vector.broadcast %39 : vector<1x128xf32> to vector<32x128xf32>
    %43 = arith.addf %41, %42 : vector<32x128xf32>
    %cst_16 = arith.constant 0.000000e+00 : f32
    %44 = vector.broadcast %cst_16 : f32 to vector<32x128xf32>
    %45 = arith.maximumf %43, %44 : vector<32x128xf32>
    %c1_i32_17 = arith.constant 1 : i32
    %46 = tpu.dynamic_rotate %45 by %c1_i32_17 dim 0 : vector<32x128xf32>, i32 -> vector<32x128xf32>
    %cst_18 = arith.constant 0.000000e+00 : f32
    %47 = vector.broadcast %cst_18 : f32 to vector<32x128xf32>
    %48 = arith.select %6, %47, %46 : vector<32x128xi1>, vector<32x128xf32>
    %c31_i32_19 = arith.constant 31 : i32
    %49 = tpu.dynamic_rotate %45 by %c31_i32_19 dim 0 : vector<32x128xf32>, i32 -> vector<32x128xf32>
    %cst_20 = arith.constant 0.000000e+00 : f32
    %50 = vector.broadcast %cst_20 : f32 to vector<32x128xf32>
    %51 = arith.select %8, %50, %49 : vector<32x128xi1>, vector<32x128xf32>
    %52 = arith.truncf %48 : vector<32x128xf32> to vector<32x128xbf16>
    %53 = arith.truncf %45 : vector<32x128xf32> to vector<32x128xbf16>
    %54 = arith.truncf %51 : vector<32x128xf32> to vector<32x128xbf16>
    %55 = tpu.concatenate %52, %53, %54 in 1 : vector<32x128xbf16>, vector<32x128xbf16>, vector<32x128xbf16> -> vector<32x384xbf16>
    %c0_21 = arith.constant 0 : index
    %c0_22 = arith.constant 0 : index
    %56 = vector.load %arg2[%c0_21, %c0_22] : memref<384x128xbf16, #tpu.memory_space<vmem>>, vector<384x128xbf16>
    %cst_23 = arith.constant dense<0.000000e+00> : vector<32x128xf32>
    %57 = tpu.matmul %55, %56, %cst_23 {dimension_numbers = #tpu.dot_dimension_numbers<[1], [0], [0], [1], [0, 0, 1, 1], [], []>} : vector<32x384xbf16>, vector<384x128xbf16>, vector<32x128xf32> -> vector<32x128xf32>
    %c0_24 = arith.constant 0 : index
    %c0_25 = arith.constant 0 : index
    %58 = vector.load %arg4[%c0_24, %c0_25] : memref<2x128xf32, #tpu.memory_space<vmem>>, vector<1x128xf32>
    %c1_26 = arith.constant 1 : index
    %c0_27 = arith.constant 0 : index
    %59 = vector.load %arg4[%c1_26, %c0_27] : memref<2x128xf32, #tpu.memory_space<vmem>>, vector<1x128xf32>
    %cst_28 = arith.constant dense<0.000000e+00> : vector<128xf32>
    %60 = vector.multi_reduction <add>, %57, %cst_28 [0] : vector<32x128xf32> to vector<128xf32>
    %61 = vector.shape_cast %60 : vector<128xf32> to vector<1x128xf32>
    %62 = arith.mulf %57, %57 : vector<32x128xf32>
    %cst_29 = arith.constant dense<0.000000e+00> : vector<128xf32>
    %63 = vector.multi_reduction <add>, %62, %cst_29 [0] : vector<32x128xf32> to vector<128xf32>
    %64 = vector.shape_cast %63 : vector<128xf32> to vector<1x128xf32>
    %cst_30 = arith.constant dense<0.000000e+00> : vector<1x128xf32>
    %65 = tpu.matmul %61, %1, %cst_30 {dimension_numbers = #tpu.dot_dimension_numbers<[1], [0], [0], [1], [0, 0, 1, 1], [], []>} : vector<1x128xf32>, vector<128x128xf32>, vector<1x128xf32> -> vector<1x128xf32>
    %cst_31 = arith.constant dense<0.000000e+00> : vector<1x128xf32>
    %66 = tpu.matmul %64, %1, %cst_31 {dimension_numbers = #tpu.dot_dimension_numbers<[1], [0], [0], [1], [0, 0, 1, 1], [], []>} : vector<1x128xf32>, vector<128x128xf32>, vector<1x128xf32> -> vector<1x128xf32>
    %67 = arith.mulf %65, %65 : vector<1x128xf32>
    %68 = arith.subf %66, %67 : vector<1x128xf32>
    %cst_32 = arith.constant 0.000000e+00 : f32
    %69 = vector.broadcast %cst_32 : f32 to vector<1x128xf32>
    %70 = arith.maximumf %68, %69 : vector<1x128xf32>
    %cst_33 = arith.constant 9.99999974E-6 : f32
    %71 = vector.broadcast %cst_33 : f32 to vector<1x128xf32>
    %72 = arith.addf %70, %71 : vector<1x128xf32>
    %73 = math.rsqrt %72 : vector<1x128xf32>
    %74 = arith.mulf %73, %58 : vector<1x128xf32>
    %75 = arith.mulf %65, %74 : vector<1x128xf32>
    %76 = arith.subf %59, %75 : vector<1x128xf32>
    %77 = vector.broadcast %74 : vector<1x128xf32> to vector<32x128xf32>
    %78 = arith.mulf %57, %77 : vector<32x128xf32>
    %79 = vector.broadcast %76 : vector<1x128xf32> to vector<32x128xf32>
    %80 = arith.addf %78, %79 : vector<32x128xf32>
    %81 = arith.addf %80, %0 : vector<32x128xf32>
    %cst_34 = arith.constant 0.000000e+00 : f32
    %82 = vector.broadcast %cst_34 : f32 to vector<32x128xf32>
    %83 = arith.maximumf %81, %82 : vector<32x128xf32>
    %c0_35 = arith.constant 0 : index
    %c0_36 = arith.constant 0 : index
    %84 = vector.load %arg6[%c0_35, %c0_36] : memref<32x128xf32, #tpu.memory_space<vmem>>, vector<32x128xf32>
    tpu.vector_store %arg6[%c0_35, %c0_36], %83 {strides = array<i32>} : memref<32x128xf32, #tpu.memory_space<vmem>>, vector<32x128xf32>,
    return
  }
}

</mosaic_0001>

<llo_original>
// kernel: tile.23
$region0: #{tile.23}
  #allocation0 [shape = 's32[1]{0}', space=sflag, size = 0x4, scoped, tag = 'scoped memory for tile.23']
  %s0 = inlined_call_operand.vmem [shape: f32[8], index: 0, kind: input, shape index: {}]
  %s1 = inlined_call_operand.vmem [shape: f32[16,8], index: 1, kind: output, shape index: {}]
  // Predicated region
  $region2: #{tile.23} parent=0 // pred_check
    _
  $region3: #{tile.23} parent=0 // pred_check_branch
    %3 = sbr.rel (0) target = $region5
  $region4: #{tile.23} parent=0 // pred_region
    _
  $region5: #{tile.23} parent=0 // pred_fallthru
    _
  %v4 = vld [vmem:[%s0] ss:$0 sm:$0xff]
  %5 = vst [vmem:[%s1] sm:$0xff] %v4
  %s6 = scalar_lea.vmem %s1, 8
  %7 = vst [vmem:[%s6] sm:$0xff] %v4

// kernel: tile.28
$region0: #{tile.28}
  %s0 = inlined_call_operand.vmem [shape: f32[16,8], index: 0, kind: input, shape index: {}]
  %s1 = inlined_call_operand.vmem [shape: f32[1,128], index: 1, kind: output, shape index: {}]
  $region1: #{tile.28} parent=0
    #allocation0 [shape = 'u8[4096]{0}', space=vmem, size = 0x1000, scoped, tag = 'scoped mem for output reshape']
    %v2 = vld [vmem:[%s0] sm:$0x1]
    %vm3 = vcmask 64512
    %4 = vst.msk [vmem:[#allocation0] sm:$0x1] %vm3, %v2
    %s5 = scalar_lea.vmem %s0, 15
    %v6 = vld [vmem:[%s5] sm:$0x1]
    %7 = vrot.lane.b32.xlu0 %v6, 120
    %v8 = vpop.permute.xlu0 %7
    %vm9 = vcmask 1048512
    %10 = vst.msk [vmem:[#allocation0] sm:$0x1] %vm9, %v8
    %s11 = scalar_lea.vmem %s0, 14
    %v12 = vld [vmem:[%s11] sm:$0x1]
    %13 = vrot.lane.b32.xlu0 %v12, 112
    %v14 = vpop.permute.xlu0 %13
    %vm15 = vcmask 982912
    %16 = vst.msk [vmem:[#allocation0] sm:$0x1] %vm15, %v14
    %s17 = scalar_lea.vmem %s0, 13
    %v18 = vld [vmem:[%s17] sm:$0x1]
    %19 = vrot.lane.b32.xlu0 %v18, 104
    %v20 = vpop.permute.xlu0 %19
    %vm21 = vcmask 917312
    %22 = vst.msk [vmem:[#allocation0] sm:$0x1] %vm21, %v20
    %s23 = scalar_lea.vmem %s0, 12
    %v24 = vld [vmem:[%s23] sm:$0x1]
    %25 = vrot.lane.b32.xlu0 %v24, 96
    %v26 = vpop.permute.xlu0 %25
    %vm27 = vcmask 851712
    %28 = vst.msk [vmem:[#allocation0] sm:$0x1] %vm27, %v26
    %s29 = scalar_lea.vmem %s0, 11
    %v30 = vld [vmem:[%s29] sm:$0x1]
    %31 = vrot.lane.b32.xlu0 %v30, 88
    %v32 = vpop.permute.xlu0 %31
    %vm33 = vcmask 786112
    %34 = vst.msk [vmem:[#allocation0] sm:$0x1] %vm33, %v32
    %s35 = scalar_lea.vmem %s0, 10
    %v36 = vld [vmem:[%s35] sm:$0x1]
    %37 = vrot.lane.b32.xlu0 %v36, 80
    %v38 = vpop.permute.xlu0 %37
    %vm39 = vcmask 720512
    %40 = vst.msk [vmem:[#allocation0] sm:$0x1] %vm39, %v38
    %s41 = scalar_lea.vmem %s0, 9
    %v42 = vld [vmem:[%s41] sm:$0x1]
    %43 = vrot.lane.b32.xlu0 %v42, 72
    %v44 = vpop.permute.xlu0 %43
    %vm45 = vcmask 654912
    %46 = vst.msk [vmem:[#allocation0] sm:$0x1] %vm45, %v44
    %s47 = scalar_lea.vmem %s0, 8
    %v48 = vld [vmem:[%s47] sm:$0x1]
    %49 = vrot.lane.b32.xlu0 %v48, 64
    %v50 = vpop.permute.xlu0 %49
    %vm51 = vcmask 589312
    %52 = vst.msk [vmem:[#allocation0] sm:$0x1] %vm51, %v50
    %s53 = scalar_lea.vmem %s0, 7
    %v54 = vld [vmem:[%s53] sm:$0x1]
    %55 = vrot.lane.b32.xlu0 %v54, 56
    %v56 = vpop.permute.xlu0 %55
    %vm57 = vcmask 523712
    %58 = vst.msk [vmem:[#allocation0] sm:$0x1] %vm57, %v56
    %s59 = scalar_lea.vmem %s0, 6
    %v60 = vld [vmem:[%s59] sm:$0x1]
    %61 = vrot.lane.b32.xlu0 %v60, 48
    %v62 = vpop.permute.xlu0 %61
    %vm63 = vcmask 458112
    %64 = vst.msk [vmem:[#allocation0] sm:$0x1] %vm63, %v62
    %s65 = scalar_lea.vmem %s0, 5
    %v66 = vld [vmem:[%s65] sm:$0x1]
    %67 = vrot.lane.b32.xlu0 %v66, 40
    %v68 = vpop.permute.xlu0 %67
    %vm69 = vcmask 392512
    %70 = vst.msk [vmem:[#allocation0] sm:$0x1] %vm69, %v68
    %s71 = scalar_lea.vmem %s0, 4
    %v72 = vld [vmem:[%s71] sm:$0x1]
    %73 = vrot.lane.b32.xlu0 %v72, 32
    %v74 = vpop.permute.xlu0 %73
    %vm75 = vcmask 326912
    %76 = vst.msk [vmem:[#allocation0] sm:$0x1] %vm75, %v74
    %s77 = scalar_lea.vmem %s0, 3
    %v78 = vld [vmem:[%s77] sm:$0x1]
    %79 = vrot.lane.b32.xlu0 %v78, 24
    %v80 = vpop.permute.xlu0 %79
    %vm81 = vcmask 261312
    %82 = vst.msk [vmem:[#allocation0] sm:$0x1] %vm81, %v80
    %s83 = scalar_lea.vmem %s0, 2
    %v84 = vld [vmem:[%s83] sm:$0x1]
    %85 = vrot.lane.b32.xlu0 %v84, 16
    %v86 = vpop.permute.xlu0 %85
    %vm87 = vcmask 195712
    %88 = vst.msk [vmem:[#allocation0] sm:$0x1] %vm87, %v86
    %s89 = scalar_lea.vmem %s0, 1
    %v90 = vld [vmem:[%s89] sm:$0x1]
    %91 = vrot.lane.b32.xlu0 %v90, 8
    %v92 = vpop.permute.xlu0 %91
    %vm93 = vcmask 130112
    %94 = vst.msk [vmem:[#allocation0] sm:$0x1] %vm93, %v92
    %s96 = sshllo.u32 0, 1
    %v98 = vld [vmem:[#allocation0] sm:%s96]
    %s99 = sshllo.u32 0, 1
    %100 = vst [vmem:[%s1] sm:%s99] %v98

// kernel: resblock_forward.1
$region0: #{resblock_forward.1}
  #allocation0 [shape = 'u32[]', space=smem, size = 0x4, offset = 0x4, fixed_abs, tag = 'smem constant byte address 0x4 - core index']
  #allocation1 [shape = 'u32[144,128]{1,0:T(1,128)}', space=vmem, size = 0x12000, scoped, tag = 'internal scratch']
  %s0 = inlined_call_operand.vmem [shape: f32[32,128], index: 0, kind: input, shape index: {}]
  %s1 = inlined_call_operand.vmem [shape: bf16[384,128], index: 1, kind: input, shape index: {}]
  %s2 = inlined_call_operand.vmem [shape: bf16[384,128], index: 2, kind: input, shape index: {}]
  %s3 = inlined_call_operand.vmem [shape: f32[2,128], index: 3, kind: input, shape index: {}]
  %s4 = inlined_call_operand.vmem [shape: f32[2,128], index: 4, kind: input, shape index: {}]
  %s5 = inlined_call_operand.vmem [shape: f32[128,128], index: 5, kind: input, shape index: {}]
  %s6 = inlined_call_operand.vmem [shape: f32[32,128], index: 6, kind: output, shape index: {}]
  %s7 = sld [smem:[#allocation0]]
  $region34: #{resblock_forward.1} parent=0
    _
  %s9 = ssub.s32 1, %s7
  %s10 = scalar_select 0, %s9, %s7
  // Predicated region
  $region2: #{resblock_forward.1} parent=0 // pred_check
    _
  $region3: #{resblock_forward.1} parent=0 // pred_check_branch
    %12 = sbr.rel (0) target = $region5
  $region4: #{resblock_forward.1} parent=0 // pred_region
    _
  $region5: #{resblock_forward.1} parent=0 // pred_fallthru
    _
  // Predicated region
  $region6: #{resblock_forward.1} parent=0 // pred_check
    _
  $region7: #{resblock_forward.1} parent=0 // pred_check_branch
    %14 = sbr.rel (0) target = $region9
  $region8: #{resblock_forward.1} parent=0 // pred_region
    _
  $region9: #{resblock_forward.1} parent=0 // pred_fallthru
    _
  // Predicated region
  $region10: #{resblock_forward.1} parent=0 // pred_check
    _
  $region11: #{resblock_forward.1} parent=0 // pred_check_branch
    %16 = sbr.rel (0) target = $region13
  $region12: #{resblock_forward.1} parent=0 // pred_region
    _
  $region13: #{resblock_forward.1} parent=0 // pred_fallthru
    _
  // Predicated region
  $region14: #{resblock_forward.1} parent=0 // pred_check
    _
  $region15: #{resblock_forward.1} parent=0 // pred_check_branch
    %18 = sbr.rel (0) target = $region17
  $region16: #{resblock_forward.1} parent=0 // pred_region
    _
  $region17: #{resblock_forward.1} parent=0 // pred_fallthru
    _
  // Predicated region
  $region18: #{resblock_forward.1} parent=0 // pred_check
    _
  $region19: #{resblock_forward.1} parent=0 // pred_check_branch
    %20 = sbr.rel (0) target = $region21
  $region20: #{resblock_forward.1} parent=0 // pred_region
    _
  $region21: #{resblock_forward.1} parent=0 // pred_fallthru
    _
  // Predicated region
  $region22: #{resblock_forward.1} parent=0 // pred_check
    _
  $region23: #{resblock_forward.1} parent=0 // pred_check_branch
    %22 = sbr.rel (0) target = $region25
  $region24: #{resblock_forward.1} parent=0 // pred_region
    _
  $region25: #{resblock_forward.1} parent=0 // pred_fallthru
    _
  %v24 = vld [vmem:[%s0] sm:$0xff]
  %v25 = vld [vmem:[%s0 + $0x8] sm:$0xff]
  %v26 = vld [vmem:[%s0 + $0x10] sm:$0xff]
  %v27 = vld [vmem:[%s0 + $0x18] sm:$0xff]
  %v28 = vld [vmem:[%s5] sm:$0xff]
  %v29 = vld [vmem:[%s5 + $0x8] sm:$0xff]
  %v30 = vld [vmem:[%s5 + $0x10] sm:$0xff]
  %v31 = vld [vmem:[%s5 + $0x18] sm:$0xff]
  %v32 = vld [vmem:[%s5 + $0x20] sm:$0xff]
  %v33 = vld [vmem:[%s5 + $0x28] sm:$0xff]
  %v34 = vld [vmem:[%s5 + $0x30] sm:$0xff]
  %v35 = vld [vmem:[%s5 + $0x38] sm:$0xff]
  %v36 = vld [vmem:[%s5 + $0x40] sm:$0xff]
  %v37 = vld [vmem:[%s5 + $0x48] sm:$0xff]
  %v38 = vld [vmem:[%s5 + $0x50] sm:$0xff]
  %v39 = vld [vmem:[%s5 + $0x58] sm:$0xff]
  %v40 = vld [vmem:[%s5 + $0x60] sm:$0xff]
  %v41 = vld [vmem:[%s5 + $0x68] sm:$0xff]
  %v42 = vld [vmem:[%s5 + $0x70] sm:$0xff]
  %v43 = vld [vmem:[%s5 + $0x78] sm:$0xff]
  %v44 = vlaneseq
  %v45 = vshrl.u32 %v44, 7
  %v46 = vadd.s32 %v45, 8
  %v47 = vadd.s32 %v45, 16
  %v48 = vadd.s32 %v45, 24
  %vm49 = vcmp.lt.s32.totalorder %v45, 0
  %v50 = vsub.s32 0, %v45
  %v51 = vsel %vm49, %v50, %v45
  %v52 = vshrl.u32 %v51, 4
  %v53 = vand.u32 %v51, 15
  %v54 = vsub.s32 0, %v53
  %v55 = vsel %vm49, %v54, %v53
  %vm56 = vcmp.lt.s32.totalorder %v46, 0
  %v57 = vsub.s32 0, %v46
  %v58 = vsel %vm56, %v57, %v46
  %v59 = vshrl.u32 %v58, 4
  %v60 = vand.u32 %v58, 15
  %v61 = vsub.s32 0, %v60
  %v62 = vsel %vm56, %v61, %v60
  %vm63 = vcmp.lt.s32.totalorder %v47, 0
  %v64 = vsub.s32 0, %v47
  %v65 = vsel %vm63, %v64, %v47
  %v66 = vshrl.u32 %v65, 4
  %v67 = vand.u32 %v65, 15
  %v68 = vsub.s32 0, %v67
  %v69 = vsel %vm63, %v68, %v67
  %vm70 = vcmp.lt.s32.totalorder %v48, 0
  %v71 = vsub.s32 0, %v48
  %v72 = vsel %vm70, %v71, %v48
  %v73 = vshrl.u32 %v72, 4
  %v74 = vand.u32 %v72, 15
  %v75 = vsub.s32 0, %v74
  %v76 = vsel %vm70, %v75, %v74
  %vm77 = vcmp.eq.s32.totalorder %v55, 0
  %vm78 = vcmp.eq.s32.totalorder %v62, 0
  %vm79 = vcmp.eq.s32.totalorder %v69, 0
  %vm80 = vcmp.eq.s32.totalorder %v76, 0
  %vm81 = vcmp.eq.s32.totalorder %v55, 15
  %vm82 = vcmp.eq.s32.totalorder %v62, 15
  %vm83 = vcmp.eq.s32.totalorder %v69, 15
  %vm84 = vcmp.eq.s32.totalorder %v76, 15
  %v85 = vrot.slane %v24, 7
  %v86 = vrot.slane %v25, 7
  %v87 = vrot.slane %v26, 7
  %v88 = vrot.slane %v27, 7
  %vm89 = vcmp.lt.s32.totalorder %v45, 1
  %v90 = vsel %vm89, %v87, %v88
  %v91 = vsel %vm89, %v86, %v87
  %v92 = vsel %vm89, %v85, %v86
  %v93 = vsel %vm89, %v88, %v85
  %v94 = vsel %vm77, 0.0, %v93
  %v95 = vsel %vm78, 0.0, %v92
  %v96 = vsel %vm79, 0.0, %v91
  %v97 = vsel %vm80, 0.0, %v90
  %v98 = vrot.slane %v24, 1
  %v99 = vrot.slane %v25, 1
  %v100 = vrot.slane %v26, 1
  %v101 = vrot.slane %v27, 1
  %vm102 = vcmp.lt.s32.totalorder %v45, 7
  %v103 = vsel %vm102, %v100, %v101
  %v104 = vsel %vm102, %v99, %v100
  %v105 = vsel %vm102, %v98, %v99
  %v106 = vsel %vm102, %v101, %v98
  %v107 = vsel %vm81, 0.0, %v105
  %v108 = vsel %vm82, 0.0, %v104
  %v109 = vsel %vm83, 0.0, %v103
  %v110 = vsel %vm84, 0.0, %v106
  %v111 = vpack.c.bf16 %v95, %v94
  %v112 = vpack.c.bf16 %v97, %v96
  %v113 = vpack.c.bf16 %v25, %v24
  %v114 = vpack.c.bf16 %v27, %v26
  %v115 = vpack.c.bf16 %v108, %v107
  %v116 = vpack.c.bf16 %v110, %v109
  %v117 = vld [vmem:[%s1] sm:$0xf]
  %v118 = vld [vmem:[%s1 + $0x4] sm:$0xf]
  %v119 = vld [vmem:[%s1 + $0x8] sm:$0xf]
  %v120 = vld [vmem:[%s1 + $0xc] sm:$0xf]
  %v121 = vld [vmem:[%s1 + $0x10] sm:$0xf]
  %v122 = vld [vmem:[%s1 + $0x14] sm:$0xf]
  %v123 = vld [vmem:[%s1 + $0x18] sm:$0xf]
  %v124 = vld [vmem:[%s1 + $0x1c] sm:$0xf]
  %v125 = vld [vmem:[%s1 + $0x20] sm:$0xf]
  %v126 = vld [vmem:[%s1 + $0x24] sm:$0xf]
  %v127 = vld [vmem:[%s1 + $0x28] sm:$0xf]
  %v128 = vld [vmem:[%s1 + $0x2c] sm:$0xf]
  %v129 = vld [vmem:[%s1 + $0x30] sm:$0xf]
  %v130 = vld [vmem:[%s1 + $0x34] sm:$0xf]
  %v131 = vld [vmem:[%s1 + $0x38] sm:$0xf]
  %v132 = vld [vmem:[%s1 + $0x3c] sm:$0xf]
  %v133 = vld [vmem:[%s1 + $0x40] sm:$0xf]
  %v134 = vld [vmem:[%s1 + $0x44] sm:$0xf]
  %v135 = vld [vmem:[%s1 + $0x48] sm:$0xf]
  %v136 = vld [vmem:[%s1 + $0x4c] sm:$0xf]
  %v137 = vld [vmem:[%s1 + $0x50] sm:$0xf]
  %v138 = vld [vmem:[%s1 + $0x54] sm:$0xf]
  %v139 = vld [vmem:[%s1 + $0x58] sm:$0xf]
  %v140 = vld [vmem:[%s1 + $0x5c] sm:$0xf]
  %v141 = vld [vmem:[%s1 + $0x60] sm:$0xf]
  %v142 = vld [vmem:[%s1 + $0x64] sm:$0xf]
  %v143 = vld [vmem:[%s1 + $0x68] sm:$0xf]
  %v144 = vld [vmem:[%s1 + $0x6c] sm:$0xf]
  %v145 = vld [vmem:[%s1 + $0x70] sm:$0xf]
  %v146 = vld [vmem:[%s1 + $0x74] sm:$0xf]
  %v147 = vld [vmem:[%s1 + $0x78] sm:$0xf]
  %v148 = vld [vmem:[%s1 + $0x7c] sm:$0xf]
  %v149 = vld [vmem:[%s1 + $0x80] sm:$0xf]
  %v150 = vld [vmem:[%s1 + $0x84] sm:$0xf]
  %v151 = vld [vmem:[%s1 + $0x88] sm:$0xf]
  %v152 = vld [vmem:[%s1 + $0x8c] sm:$0xf]
  %v153 = vld [vmem:[%s1 + $0x90] sm:$0xf]
  %v154 = vld [vmem:[%s1 + $0x94] sm:$0xf]
  %v155 = vld [vmem:[%s1 + $0x98] sm:$0xf]
  %v156 = vld [vmem:[%s1 + $0x9c] sm:$0xf]
  %v157 = vld [vmem:[%s1 + $0xa0] sm:$0xf]
  %v158 = vld [vmem:[%s1 + $0xa4] sm:$0xf]
  %v159 = vld [vmem:[%s1 + $0xa8] sm:$0xf]
  %v160 = vld [vmem:[%s1 + $0xac] sm:$0xf]
  %v161 = vld [vmem:[%s1 + $0xb0] sm:$0xf]
  %v162 = vld [vmem:[%s1 + $0xb4] sm:$0xf]
  %v163 = vld [vmem:[%s1 + $0xb8] sm:$0xf]
  %v164 = vld [vmem:[%s1 + $0xbc] sm:$0xf]
  %v213 = vunpack.c.l.b16 %v117
  %v214 = vunpack.c.l.b16 %v118
  %v215 = vunpack.c.l.b16 %v119
  %v216 = vunpack.c.l.b16 %v120
  %v217 = vunpack.c.l.b16 %v121
  %v218 = vunpack.c.l.b16 %v122
  %v219 = vunpack.c.l.b16 %v123
  %v220 = vunpack.c.l.b16 %v124
  %v221 = vunpack.c.l.b16 %v125
  %v222 = vunpack.c.l.b16 %v126
  %v223 = vunpack.c.l.b16 %v127
  %v224 = vunpack.c.l.b16 %v128
  %v225 = vunpack.c.l.b16 %v129
  %v226 = vunpack.c.l.b16 %v130
  %v227 = vunpack.c.l.b16 %v131
  %v228 = vunpack.c.l.b16 %v132
  %v229 = vunpack.c.l.b16 %v133
  %v230 = vunpack.c.l.b16 %v134
  %v231 = vunpack.c.l.b16 %v135
  %v232 = vunpack.c.l.b16 %v136
  %v233 = vunpack.c.l.b16 %v137
  %v234 = vunpack.c.l.b16 %v138
  %v235 = vunpack.c.l.b16 %v139
  %v236 = vunpack.c.l.b16 %v140
  %v237 = vunpack.c.l.b16 %v141
  %v238 = vunpack.c.l.b16 %v142
  %v239 = vunpack.c.l.b16 %v143
  %v240 = vunpack.c.l.b16 %v144
  %v241 = vunpack.c.l.b16 %v145
  %v242 = vunpack.c.l.b16 %v146
  %v243 = vunpack.c.l.b16 %v147
  %v244 = vunpack.c.l.b16 %v148
  %v245 = vunpack.c.l.b16 %v149
  %v246 = vunpack.c.l.b16 %v150
  %v247 = vunpack.c.l.b16 %v151
  %v248 = vunpack.c.l.b16 %v152
  %v249 = vunpack.c.l.b16 %v153
  %v250 = vunpack.c.l.b16 %v154
  %v251 = vunpack.c.l.b16 %v155
  %v252 = vunpack.c.l.b16 %v156
  %v253 = vunpack.c.l.b16 %v157
  %v254 = vunpack.c.l.b16 %v158
  %v255 = vunpack.c.l.b16 %v159
  %v256 = vunpack.c.l.b16 %v160
  %v257 = vunpack.c.l.b16 %v161
  %v258 = vunpack.c.l.b16 %v162
  %v259 = vunpack.c.l.b16 %v163
  %v260 = vunpack.c.l.b16 %v164
  %v261 = vpack.c.b16 %v214, %v213
  %v262 = vpack.c.b16 %v216, %v215
  %v263 = vpack.c.b16 %v218, %v217
  %v264 = vpack.c.b16 %v220, %v219
  %v265 = vpack.c.b16 %v222, %v221
  %v266 = vpack.c.b16 %v224, %v223
  %v267 = vpack.c.b16 %v226, %v225
  %v268 = vpack.c.b16 %v228, %v227
  %v269 = vpack.c.b16 %v230, %v229
  %v270 = vpack.c.b16 %v232, %v231
  %v271 = vpack.c.b16 %v234, %v233
  %v272 = vpack.c.b16 %v236, %v235
  %v273 = vpack.c.b16 %v238, %v237
  %v274 = vpack.c.b16 %v240, %v239
  %v275 = vpack.c.b16 %v242, %v241
  %v276 = vpack.c.b16 %v244, %v243
  %v277 = vpack.c.b16 %v246, %v245
  %v278 = vpack.c.b16 %v248, %v247
  %v279 = vpack.c.b16 %v250, %v249
  %v280 = vpack.c.b16 %v252, %v251
  %v281 = vpack.c.b16 %v254, %v253
  %v282 = vpack.c.b16 %v256, %v255
  %v283 = vpack.c.b16 %v258, %v257
  %v284 = vpack.c.b16 %v260, %v259
  %309 = vmatprep.subr.bf16.mxu0 0
  %310 = vmatpush1.bf16.msra.mxu0 %v261
  %311 = vmatprep.subr.bf16.mxu0 0
  %312 = vmatpush1.bf16.msra.mxu0 %v262
  %313 = vmatprep.subr.bf16.mxu0 0
  %314 = vmatpush1.bf16.msra.mxu0 %v263
  %315 = vmatprep.subr.bf16.mxu0 0
  %316 = vmatpush1.bf16.msra.mxu0 %v264
  %317 = vmatprep.subr.bf16.mxu0 0
  %318 = vmatpush1.bf16.msra.mxu0 %v265
  %319 = vmatprep.subr.bf16.mxu0 0
  %320 = vmatpush1.bf16.msra.mxu0 %v266
  %321 = vmatprep.subr.bf16.mxu0 0
  %322 = vmatpush1.bf16.msra.mxu0 %v267
  %323 = vmatprep.subr.bf16.mxu0 0
  %324 = vmatpush1.bf16.msra.mxu0 %v268
  %325 = vmatprep.subr.bf16.mxu0 0
  %326 = vmatpush1.bf16.msra.mxu0 %v269
  %327 = vmatprep.subr.bf16.mxu0 0
  %328 = vmatpush1.bf16.msra.mxu0 %v270
  %329 = vmatprep.subr.bf16.mxu0 0
  %330 = vmatpush1.bf16.msra.mxu0 %v271
  %331 = vmatprep.subr.bf16.mxu0 0
  %332 = vmatpush1.bf16.msra.mxu0 %v272
  %333 = vmatprep.subr.bf16.mxu0 0
  %334 = vmatpush1.bf16.msra.mxu0 %v273
  %335 = vmatprep.subr.bf16.mxu0 0
  %336 = vmatpush1.bf16.msra.mxu0 %v274
  %337 = vmatprep.subr.bf16.mxu0 0
  %338 = vmatpush1.bf16.msra.mxu0 %v275
  %339 = vmatprep.subr.bf16.mxu0 0
  %340 = vmatpush1.bf16.msra.mxu0 %v276
  %341 = vmatprep.mubr.bf16.mxu0 %v113
  %342 = vmatmul.mubr.bf16.gmra.mrb[0].mxu0 %v111
  %v343 = vpop.f32.mrb[0].mxu0
  %v344 = vadd.f32 0.0, %v343
  %v345 = vpop.f32.mrb[0].mxu0
  %v346 = vpop.f32.mrb[0].mxu0
  %v347 = vadd.f32 0.0, %v346
  %v348 = vpop.f32.mrb[0].mxu0
  %349 = vmatprep.mubr.bf16.mxu0 %v114
  %350 = vmatmul.mubr.bf16.gmra.mrb[0].mxu0 %v112
  %v351 = vpop.f32.mrb[0].mxu0
  %v352 = vadd.f32 0.0, %v351
  %v353 = vpop.f32.mrb[0].mxu0
  %v354 = vpop.f32.mrb[0].mxu0
  %v355 = vadd.f32 0.0, %v354
  %v356 = vpop.f32.mrb[0].mxu0
  %357 = vdwg.mxu0
  %358 = vmatprep.subr.bf16.mxu0 0
  %359 = vmatpush1.bf16.msra.mxu0 %v277
  %360 = vmatprep.subr.bf16.mxu0 0
  %361 = vmatpush1.bf16.msra.mxu0 %v278
  %362 = vmatprep.subr.bf16.mxu0 0
  %363 = vmatpush1.bf16.msra.mxu0 %v279
  %364 = vmatprep.subr.bf16.mxu0 0
  %365 = vmatpush1.bf16.msra.mxu0 %v280
  %366 = vmatprep.subr.bf16.mxu0 0
  %367 = vmatpush1.bf16.msra.mxu0 %v281
  %368 = vmatprep.subr.bf16.mxu0 0
  %369 = vmatpush1.bf16.msra.mxu0 %v282
  %370 = vmatprep.subr.bf16.mxu0 0
  %371 = vmatpush1.bf16.msra.mxu0 %v283
  %372 = vmatprep.subr.bf16.mxu0 0
  %373 = vmatpush1.bf16.msra.mxu0 %v284
  %374 = vmatprep.subr.bf16.mxu0 0
  %375 = vmatpush1.bf16.msra.mxu0 0
  %376 = vmatprep.subr.bf16.mxu0 0
  %377 = vmatpush1.bf16.msra.mxu0 0
  %378 = vmatprep.subr.bf16.mxu0 0
  %379 = vmatpush1.bf16.msra.mxu0 0
  %380 = vmatprep.subr.bf16.mxu0 0
  %381 = vmatpush1.bf16.msra.mxu0 0
  %382 = vmatprep.subr.bf16.mxu0 0
  %383 = vmatpush1.bf16.msra.mxu0 0
  %384 = vmatprep.subr.bf16.mxu0 0
  %385 = vmatpush1.bf16.msra.mxu0 0
  %386 = vmatprep.subr.bf16.mxu0 0
  %387 = vmatpush1.bf16.msra.mxu0 0
  %388 = vmatprep.subr.bf16.mxu0 0
  %389 = vmatpush1.bf16.msra.mxu0 0
  %390 = vmatprep.mubr.bf16.mxu0 0
  %391 = vmatmul.mubr.bf16.gmra.mrb[0].mxu0 %v115
  %v392 = vpop.f32.mrb[0].mxu0
  %v393 = vadd.f32 %v344, %v392
  %v394 = vpop.f32.mrb[0].mxu0
  %v395 = vpop.f32.mrb[0].mxu0
  %v396 = vadd.f32 %v347, %v395
  %v397 = vpop.f32.mrb[0].mxu0
  %398 = vmatprep.mubr.bf16.mxu0 0
  %399 = vmatmul.mubr.bf16.gmra.mrb[0].mxu0 %v116
  %v400 = vpop.f32.mrb[0].mxu0
  %v401 = vadd.f32 %v352, %v400
  %v402 = vpop.f32.mrb[0].mxu0
  %v403 = vpop.f32.mrb[0].mxu0
  %v404 = vadd.f32 %v355, %v403
  %v405 = vpop.f32.mrb[0].mxu0
  %406 = vdwg.mxu0
  %v407 = vld [vmem:[%s3] sm:$0x1]
  %v408 = vld [vmem:[%s3 + $0x1] sm:$0x1]
  %v409 = vadd.f32 %v393, %v396
  %v410 = vadd.f32 %v409, %v401
  %v411 = vadd.f32 %v410, %v404
  %v412 = vrot.slane %v411, 4
  %v413 = vadd.f32 %v411, %v412
  %v414 = vrot.slane %v413, 2
  %v415 = vadd.f32 %v413, %v414
  %v416 = vrot.slane %v415, 1
  %v417 = vadd.f32 %v415, %v416
  %v418 = vmul.f32 %v393, %v393
  %v419 = vmul.f32 %v396, %v396
  %v420 = vmul.f32 %v401, %v401
  %v421 = vmul.f32 %v404, %v404
  %v422 = vadd.f32 %v418, %v419
  %v423 = vadd.f32 %v422, %v420
  %v424 = vadd.f32 %v423, %v421
  %v425 = vrot.slane %v424, 4
  %v426 = vadd.f32 %v424, %v425
  %v427 = vrot.slane %v426, 2
  %v428 = vadd.f32 %v426, %v427
  %v429 = vrot.slane %v428, 1
  %v430 = vadd.f32 %v428, %v429
  %431 = vmatprep.subr.mxu0 0.0
  %432 = vmatpush1.msra.mxu0 %v28
  %433 = vmatprep.subr.mxu0 0.0
  %434 = vmatpush1.msra.mxu0 %v29
  %435 = vmatprep.subr.mxu0 0.0
  %436 = vmatpush1.msra.mxu0 %v30
  %437 = vmatprep.subr.mxu0 0.0
  %438 = vmatpush1.msra.mxu0 %v31
  %439 = vmatprep.subr.mxu0 0.0
  %440 = vmatpush1.msra.mxu0 %v32
  %441 = vmatprep.subr.mxu0 0.0
  %442 = vmatpush1.msra.mxu0 %v33
  %443 = vmatprep.subr.mxu0 0.0
  %444 = vmatpush1.msra.mxu0 %v34
  %445 = vmatprep.subr.mxu0 0.0
  %446 = vmatpush1.msra.mxu0 %v35
  %447 = vmatprep.subr.mxu0 0.0
  %448 = vmatpush1.msra.mxu0 %v36
  %449 = vmatprep.subr.mxu0 0.0
  %450 = vmatpush1.msra.mxu0 %v37
  %451 = vmatprep.subr.mxu0 0.0
  %452 = vmatpush1.msra.mxu0 %v38
  %453 = vmatprep.subr.mxu0 0.0
  %454 = vmatpush1.msra.mxu0 %v39
  %455 = vmatprep.subr.mxu0 0.0
  %456 = vmatpush1.msra.mxu0 %v40
  %457 = vmatprep.subr.mxu0 0.0
  %458 = vmatpush1.msra.mxu0 %v41
  %459 = vmatprep.subr.mxu0 0.0
  %460 = vmatpush1.msra.mxu0 %v42
  %461 = vmatprep.subr.mxu0 0.0
  %462 = vmatpush1.msra.mxu0 %v43
  %463 = vmatprep.subr.mxu0 0.0
  %464 = vmatpush1.msra.mxu0 0.0
  %465 = vmatprep.subr.mxu0 0.0
  %466 = vmatpush1.msra.mxu0 0.0
  %467 = vmatprep.subr.mxu0 0.0
  %468 = vmatpush1.msra.mxu0 0.0
  %469 = vmatprep.subr.mxu0 0.0
  %470 = vmatpush1.msra.mxu0 0.0
  %471 = vmatprep.subr.mxu0 0.0
  %472 = vmatpush1.msra.mxu0 0.0
  %473 = vmatprep.subr.mxu0 0.0
  %474 = vmatpush1.msra.mxu0 0.0
  %475 = vmatprep.subr.mxu0 0.0
  %476 = vmatpush1.msra.mxu0 0.0
  %477 = vmatprep.subr.mxu0 0.0
  %478 = vmatpush1.msra.mxu0 0.0
  %479 = vmatprep.subr.mxu0 0.0
  %480 = vmatpush1.msra.mxu0 0.0
  %481 = vmatprep.subr.mxu0 0.0
  %482 = vmatpush1.msra.mxu0 0.0
  %483 = vmatprep.subr.mxu0 0.0
  %484 = vmatpush1.msra.mxu0 0.0
  %485 = vmatprep.subr.mxu0 0.0
  %486 = vmatpush1.msra.mxu0 0.0
  %487 = vmatprep.subr.mxu0 0.0
  %488 = vmatpush1.msra.mxu0 0.0
  %489 = vmatprep.subr.mxu0 0.0
  %490 = vmatpush1.msra.mxu0 0.0
  %491 = vmatprep.subr.mxu0 0.0
  %492 = vmatpush1.msra.mxu0 0.0
  %493 = vmatprep.subr.mxu0 0.0
  %494 = vmatpush1.msra.mxu0 0.0
  %495 = vmatprep.mubr.f32.mxu0 0.0
  %496 = vmatmul.mubr.f32.gmra.mrb[0].mxu0 %v417
  %v497 = vpop.f32.mrb[0].mxu0
  %v498 = vadd.f32 0.0, %v497
  %v499 = vpop.f32.mrb[0].mxu0
  %500 = vdwg.mxu0
  %501 = vmatprep.subr.mxu0 0.0
  %502 = vmatpush1.msra.mxu0 %v28
  %503 = vmatprep.subr.mxu0 0.0
  %504 = vmatpush1.msra.mxu0 %v29
  %505 = vmatprep.subr.mxu0 0.0
  %506 = vmatpush1.msra.mxu0 %v30
  %507 = vmatprep.subr.mxu0 0.0
  %508 = vmatpush1.msra.mxu0 %v31
  %509 = vmatprep.subr.mxu0 0.0
  %510 = vmatpush1.msra.mxu0 %v32
  %511 = vmatprep.subr.mxu0 0.0
  %512 = vmatpush1.msra.mxu0 %v33
  %513 = vmatprep.subr.mxu0 0.0
  %514 = vmatpush1.msra.mxu0 %v34
  %515 = vmatprep.subr.mxu0 0.0
  %516 = vmatpush1.msra.mxu0 %v35
  %517 = vmatprep.subr.mxu0 0.0
  %518 = vmatpush1.msra.mxu0 %v36
  %519 = vmatprep.subr.mxu0 0.0
  %520 = vmatpush1.msra.mxu0 %v37
  %521 = vmatprep.subr.mxu0 0.0
  %522 = vmatpush1.msra.mxu0 %v38
  %523 = vmatprep.subr.mxu0 0.0
  %524 = vmatpush1.msra.mxu0 %v39
  %525 = vmatprep.subr.mxu0 0.0
  %526 = vmatpush1.msra.mxu0 %v40
  %527 = vmatprep.subr.mxu0 0.0
  %528 = vmatpush1.msra.mxu0 %v41
  %529 = vmatprep.subr.mxu0 0.0
  %530 = vmatpush1.msra.mxu0 %v42
  %531 = vmatprep.subr.mxu0 0.0
  %532 = vmatpush1.msra.mxu0 %v43
  %533 = vmatprep.subr.mxu0 0.0
  %534 = vmatpush1.msra.mxu0 0.0
  %535 = vmatprep.subr.mxu0 0.0
  %536 = vmatpush1.msra.mxu0 0.0
  %537 = vmatprep.subr.mxu0 0.0
  %538 = vmatpush1.msra.mxu0 0.0
  %539 = vmatprep.subr.mxu0 0.0
  %540 = vmatpush1.msra.mxu0 0.0
  %541 = vmatprep.subr.mxu0 0.0
  %542 = vmatpush1.msra.mxu0 0.0
  %543 = vmatprep.subr.mxu0 0.0
  %544 = vmatpush1.msra.mxu0 0.0
  %545 = vmatprep.subr.mxu0 0.0
  %546 = vmatpush1.msra.mxu0 0.0
  %547 = vmatprep.subr.mxu0 0.0
  %548 = vmatpush1.msra.mxu0 0.0
  %549 = vmatprep.subr.mxu0 0.0
  %550 = vmatpush1.msra.mxu0 0.0
  %551 = vmatprep.subr.mxu0 0.0
  %552 = vmatpush1.msra.mxu0 0.0
  %553 = vmatprep.subr.mxu0 0.0
  %554 = vmatpush1.msra.mxu0 0.0
  %555 = vmatprep.subr.mxu0 0.0
  %556 = vmatpush1.msra.mxu0 0.0
  %557 = vmatprep.subr.mxu0 0.0
  %558 = vmatpush1.msra.mxu0 0.0
  %559 = vmatprep.subr.mxu0 0.0
  %560 = vmatpush1.msra.mxu0 0.0
  %561 = vmatprep.subr.mxu0 0.0
  %562 = vmatpush1.msra.mxu0 0.0
  %563 = vmatprep.subr.mxu0 0.0
  %564 = vmatpush1.msra.mxu0 0.0
  %565 = vmatprep.mubr.f32.mxu0 0.0
  %566 = vmatmul.mubr.f32.gmra.mrb[0].mxu0 %v430
  %v567 = vpop.f32.mrb[0].mxu0
  %v568 = vadd.f32 0.0, %v567
  %v569 = vpop.f32.mrb[0].mxu0
  %570 = vdwg.mxu0
  %v571 = vmul.f32 %v498, %v498
  %v572 = vsub.f32 %v568, %v571
  %v573 = vmax.f32 %v572, 0.0
  %v574 = vadd.f32 %v573, 1e-05
  %v575 = vrsqrt.pop %v574
  %v576 = vmul.f32 %v575, %v407
  %v577 = vmul.f32 %v498, %v576
  %v578 = vsub.f32 %v408, %v577
  %v579 = vlaneseq
  %v580 = vshrl.u32 %v579, 7
  %v581 = vsub.s32 0, %v580
  %v582 = vrot.slane %v576, %v581
  %v583 = vmul.f32 %v393, %v582
  %v584 = vmul.f32 %v396, %v582
  %v585 = vmul.f32 %v401, %v582
  %v586 = vmul.f32 %v404, %v582
  %v587 = vlaneseq
  %v588 = vshrl.u32 %v587, 7
  %v589 = vsub.s32 0, %v588
  %v590 = vrot.slane %v578, %v589
  %v591 = vadd.f32 %v583, %v590
  %v592 = vadd.f32 %v584, %v590
  %v593 = vadd.f32 %v585, %v590
  %v594 = vadd.f32 %v586, %v590
  %v595 = vmax.f32 %v591, 0.0
  %v596 = vmax.f32 %v592, 0.0
  %v597 = vmax.f32 %v593, 0.0
  %v598 = vmax.f32 %v594, 0.0
  %v599 = vrot.slane %v595, 7
  %v600 = vrot.slane %v596, 7
  %v601 = vrot.slane %v597, 7
  %v602 = vrot.slane %v598, 7
  %v603 = vsel %vm89, %v601, %v602
  %v604 = vsel %vm89, %v600, %v601
  %v605 = vsel %vm89, %v599, %v600
  %v606 = vsel %vm89, %v602, %v599
  %v607 = vsel %vm77, 0.0, %v606
  %v608 = vsel %vm78, 0.0, %v605
  %v609 = vsel %vm79, 0.0, %v604
  %v610 = vsel %vm80, 0.0, %v603
  %v611 = vrot.slane %v595, 1
  %v612 = vrot.slane %v596, 1
  %v613 = vrot.slane %v597, 1
  %v614 = vrot.slane %v598, 1
  %v615 = vsel %vm102, %v613, %v614
  %v616 = vsel %vm102, %v612, %v613
  %v617 = vsel %vm102, %v611, %v612
  %v618 = vsel %vm102, %v614, %v611
  %v619 = vsel %vm81, 0.0, %v617
  %v620 = vsel %vm82, 0.0, %v616
  %v621 = vsel %vm83, 0.0, %v615
  %v622 = vsel %vm84, 0.0, %v618
  %v623 = vpack.c.bf16 %v608, %v607
  %v624 = vpack.c.bf16 %v610, %v609
  %v625 = vpack.c.bf16 %v596, %v595
  %v626 = vpack.c.bf16 %v598, %v597
  %v627 = vpack.c.bf16 %v620, %v619
  %v628 = vpack.c.bf16 %v622, %v621
  %v629 = vld [vmem:[%s2] sm:$0xf]
  %v630 = vld [vmem:[%s2 + $0x4] sm:$0xf]
  %v631 = vld [vmem:[%s2 + $0x8] sm:$0xf]
  %v632 = vld [vmem:[%s2 + $0xc] sm:$0xf]
  %v633 = vld [vmem:[%s2 + $0x10] sm:$0xf]
  %v634 = vld [vmem:[%s2 + $0x14] sm:$0xf]
  %v635 = vld [vmem:[%s2 + $0x18] sm:$0xf]
  %v636 = vld [vmem:[%s2 + $0x1c] sm:$0xf]
  %v637 = vld [vmem:[%s2 + $0x20] sm:$0xf]
  %v638 = vld [vmem:[%s2 + $0x24] sm:$0xf]
  %v639 = vld [vmem:[%s2 + $0x28] sm:$0xf]
  %v640 = vld [vmem:[%s2 + $0x2c] sm:$0xf]
  %v641 = vld [vmem:[%s2 + $0x30] sm:$0xf]
  %v642 = vld [vmem:[%s2 + $0x34] sm:$0xf]
  %v643 = vld [vmem:[%s2 + $0x38] sm:$0xf]
  %v644 = vld [vmem:[%s2 + $0x3c] sm:$0xf]
  %v645 = vld [vmem:[%s2 + $0x40] sm:$0xf]
  %v646 = vld [vmem:[%s2 + $0x44] sm:$0xf]
  %v647 = vld [vmem:[%s2 + $0x48] sm:$0xf]
  %v648 = vld [vmem:[%s2 + $0x4c] sm:$0xf]
  %v649 = vld [vmem:[%s2 + $0x50] sm:$0xf]
  %v650 = vld [vmem:[%s2 + $0x54] sm:$0xf]
  %v651 = vld [vmem:[%s2 + $0x58] sm:$0xf]
  %v652 = vld [vmem:[%s2 + $0x5c] sm:$0xf]
  %v653 = vld [vmem:[%s2 + $0x60] sm:$0xf]
  %v654 = vld [vmem:[%s2 + $0x64] sm:$0xf]
  %v655 = vld [vmem:[%s2 + $0x68] sm:$0xf]
  %v656 = vld [vmem:[%s2 + $0x6c] sm:$0xf]
  %v657 = vld [vmem:[%s2 + $0x70] sm:$0xf]
  %v658 = vld [vmem:[%s2 + $0x74] sm:$0xf]
  %v659 = vld [vmem:[%s2 + $0x78] sm:$0xf]
  %v660 = vld [vmem:[%s2 + $0x7c] sm:$0xf]
  %v661 = vld [vmem:[%s2 + $0x80] sm:$0xf]
  %v662 = vld [vmem:[%s2 + $0x84] sm:$0xf]
  %v663 = vld [vmem:[%s2 + $0x88] sm:$0xf]
  %v664 = vld [vmem:[%s2 + $0x8c] sm:$0xf]
  %v665 = vld [vmem:[%s2 + $0x90] sm:$0xf]
  %v666 = vld [vmem:[%s2 + $0x94] sm:$0xf]
  %v667 = vld [vmem:[%s2 + $0x98] sm:$0xf]
  %v668 = vld [vmem:[%s2 + $0x9c] sm:$0xf]
  %v669 = vld [vmem:[%s2 + $0xa0] sm:$0xf]
  %v670 = vld [vmem:[%s2 + $0xa4] sm:$0xf]
  %v671 = vld [vmem:[%s2 + $0xa8] sm:$0xf]
  %v672 = vld [vmem:[%s2 + $0xac] sm:$0xf]
  %v673 = vld [vmem:[%s2 + $0xb0] sm:$0xf]
  %v674 = vld [vmem:[%s2 + $0xb4] sm:$0xf]
  %v675 = vld [vmem:[%s2 + $0xb8] sm:$0xf]
  %v676 = vld [vmem:[%s2 + $0xbc] sm:$0xf]
  %v725 = vunpack.c.l.b16 %v629
  %v726 = vunpack.c.l.b16 %v630
  %v727 = vunpack.c.l.b16 %v631
  %v728 = vunpack.c.l.b16 %v632
  %v729 = vunpack.c.l.b16 %v633
  %v730 = vunpack.c.l.b16 %v634
  %v731 = vunpack.c.l.b16 %v635
  %v732 = vunpack.c.l.b16 %v636
  %v733 = vunpack.c.l.b16 %v637
  %v734 = vunpack.c.l.b16 %v638
  %v735 = vunpack.c.l.b16 %v639
  %v736 = vunpack.c.l.b16 %v640
  %v737 = vunpack.c.l.b16 %v641
  %v738 = vunpack.c.l.b16 %v642
  %v739 = vunpack.c.l.b16 %v643
  %v740 = vunpack.c.l.b16 %v644
  %v741 = vunpack.c.l.b16 %v645
  %v742 = vunpack.c.l.b16 %v646
  %v743 = vunpack.c.l.b16 %v647
  %v744 = vunpack.c.l.b16 %v648
  %v745 = vunpack.c.l.b16 %v649
  %v746 = vunpack.c.l.b16 %v650
  %v747 = vunpack.c.l.b16 %v651
  %v748 = vunpack.c.l.b16 %v652
  %v749 = vunpack.c.l.b16 %v653
  %v750 = vunpack.c.l.b16 %v654
  %v751 = vunpack.c.l.b16 %v655
  %v752 = vunpack.c.l.b16 %v656
  %v753 = vunpack.c.l.b16 %v657
  %v754 = vunpack.c.l.b16 %v658
  %v755 = vunpack.c.l.b16 %v659
  %v756 = vunpack.c.l.b16 %v660
  %v757 = vunpack.c.l.b16 %v661
  %v758 = vunpack.c.l.b16 %v662
  %v759 = vunpack.c.l.b16 %v663
  %v760 = vunpack.c.l.b16 %v664
  %v761 = vunpack.c.l.b16 %v665
  %v762 = vunpack.c.l.b16 %v666
  %v763 = vunpack.c.l.b16 %v667
  %v764 = vunpack.c.l.b16 %v668
  %v765 = vunpack.c.l.b16 %v669
  %v766 = vunpack.c.l.b16 %v670
  %v767 = vunpack.c.l.b16 %v671
  %v768 = vunpack.c.l.b16 %v672
  %v769 = vunpack.c.l.b16 %v673
  %v770 = vunpack.c.l.b16 %v674
  %v771 = vunpack.c.l.b16 %v675
  %v772 = vunpack.c.l.b16 %v676
  %v773 = vpack.c.b16 %v726, %v725
  %v774 = vpack.c.b16 %v728, %v727
  %v775 = vpack.c.b16 %v730, %v729
  %v776 = vpack.c.b16 %v732, %v731
  %v777 = vpack.c.b16 %v734, %v733
  %v778 = vpack.c.b16 %v736, %v735
  %v779 = vpack.c.b16 %v738, %v737
  %v780 = vpack.c.b16 %v740, %v739
  %v781 = vpack.c.b16 %v742, %v741
  %v782 = vpack.c.b16 %v744, %v743
  %v783 = vpack.c.b16 %v746, %v745
  %v784 = vpack.c.b16 %v748, %v747
  %v785 = vpack.c.b16 %v750, %v749
  %v786 = vpack.c.b16 %v752, %v751
  %v787 = vpack.c.b16 %v754, %v753
  %v788 = vpack.c.b16 %v756, %v755
  %v789 = vpack.c.b16 %v758, %v757
  %v790 = vpack.c.b16 %v760, %v759
  %v791 = vpack.c.b16 %v762, %v761
  %v792 = vpack.c.b16 %v764, %v763
  %v793 = vpack.c.b16 %v766, %v765
  %v794 = vpack.c.b16 %v768, %v767
  %v795 = vpack.c.b16 %v770, %v769
  %v796 = vpack.c.b16 %v772, %v771
  %821 = vmatprep.subr.bf16.mxu0 0
  %822 = vmatpush1.bf16.msra.mxu0 %v773
  %823 = vmatprep.subr.bf16.mxu0 0
  %824 = vmatpush1.bf16.msra.mxu0 %v774
  %825 = vmatprep.subr.bf16.mxu0 0
  %826 = vmatpush1.bf16.msra.mxu0 %v775
  %827 = vmatprep.subr.bf16.mxu0 0
  %828 = vmatpush1.bf16.msra.mxu0 %v776
  %829 = vmatprep.subr.bf16.mxu0 0
  %830 = vmatpush1.bf16.msra.mxu0 %v777
  %831 = vmatprep.subr.bf16.mxu0 0
  %832 = vmatpush1.bf16.msra.mxu0 %v778
  %833 = vmatprep.subr.bf16.mxu0 0
  %834 = vmatpush1.bf16.msra.mxu0 %v779
  %835 = vmatprep.subr.bf16.mxu0 0
  %836 = vmatpush1.bf16.msra.mxu0 %v780
  %837 = vmatprep.subr.bf16.mxu0 0
  %838 = vmatpush1.bf16.msra.mxu0 %v781
  %839 = vmatprep.subr.bf16.mxu0 0
  %840 = vmatpush1.bf16.msra.mxu0 %v782
  %841 = vmatprep.subr.bf16.mxu0 0
  %842 = vmatpush1.bf16.msra.mxu0 %v783
  %843 = vmatprep.subr.bf16.mxu0 0
  %844 = vmatpush1.bf16.msra.mxu0 %v784
  %845 = vmatprep.subr.bf16.mxu0 0
  %846 = vmatpush1.bf16.msra.mxu0 %v785
  %847 = vmatprep.subr.bf16.mxu0 0
  %848 = vmatpush1.bf16.msra.mxu0 %v786
  %849 = vmatprep.subr.bf16.mxu0 0
  %850 = vmatpush1.bf16.msra.mxu0 %v787
  %851 = vmatprep.subr.bf16.mxu0 0
  %852 = vmatpush1.bf16.msra.mxu0 %v788
  %853 = vmatprep.mubr.bf16.mxu0 %v625
  %854 = vmatmul.mubr.bf16.gmra.mrb[0].mxu0 %v623
  %v855 = vpop.f32.mrb[0].mxu0
  %v856 = vadd.f32 0.0, %v855
  %v857 = vpop.f32.mrb[0].mxu0
  %v858 = vpop.f32.mrb[0].mxu0
  %v859 = vadd.f32 0.0, %v858
  %v860 = vpop.f32.mrb[0].mxu0
  %861 = vmatprep.mubr.bf16.mxu0 %v626
  %862 = vmatmul.mubr.bf16.gmra.mrb[0].mxu0 %v624
  %v863 = vpop.f32.mrb[0].mxu0
  %v864 = vadd.f32 0.0, %v863
  %v865 = vpop.f32.mrb[0].mxu0
  %v866 = vpop.f32.mrb[0].mxu0
  %v867 = vadd.f32 0.0, %v866
  %v868 = vpop.f32.mrb[0].mxu0
  %869 = vdwg.mxu0
  %870 = vmatprep.subr.bf16.mxu0 0
  %871 = vmatpush1.bf16.msra.mxu0 %v789
  %872 = vmatprep.subr.bf16.mxu0 0
  %873 = vmatpush1.bf16.msra.mxu0 %v790
  %874 = vmatprep.subr.bf16.mxu0 0
  %875 = vmatpush1.bf16.msra.mxu0 %v791
  %876 = vmatprep.subr.bf16.mxu0 0
  %877 = vmatpush1.bf16.msra.mxu0 %v792
  %878 = vmatprep.subr.bf16.mxu0 0
  %879 = vmatpush1.bf16.msra.mxu0 %v793
  %880 = vmatprep.subr.bf16.mxu0 0
  %881 = vmatpush1.bf16.msra.mxu0 %v794
  %882 = vmatprep.subr.bf16.mxu0 0
  %883 = vmatpush1.bf16.msra.mxu0 %v795
  %884 = vmatprep.subr.bf16.mxu0 0
  %885 = vmatpush1.bf16.msra.mxu0 %v796
  %886 = vmatprep.subr.bf16.mxu0 0
  %887 = vmatpush1.bf16.msra.mxu0 0
  %888 = vmatprep.subr.bf16.mxu0 0
  %889 = vmatpush1.bf16.msra.mxu0 0
  %890 = vmatprep.subr.bf16.mxu0 0
  %891 = vmatpush1.bf16.msra.mxu0 0
  %892 = vmatprep.subr.bf16.mxu0 0
  %893 = vmatpush1.bf16.msra.mxu0 0
  %894 = vmatprep.subr.bf16.mxu0 0
  %895 = vmatpush1.bf16.msra.mxu0 0
  %896 = vmatprep.subr.bf16.mxu0 0
  %897 = vmatpush1.bf16.msra.mxu0 0
  %898 = vmatprep.subr.bf16.mxu0 0
  %899 = vmatpush1.bf16.msra.mxu0 0
  %900 = vmatprep.subr.bf16.mxu0 0
  %901 = vmatpush1.bf16.msra.mxu0 0
  %902 = vmatprep.mubr.bf16.mxu0 0
  %903 = vmatmul.mubr.bf16.gmra.mrb[0].mxu0 %v627
  %v904 = vpop.f32.mrb[0].mxu0
  %v905 = vadd.f32 %v856, %v904
  %v906 = vpop.f32.mrb[0].mxu0
  %v907 = vpop.f32.mrb[0].mxu0
  %v908 = vadd.f32 %v859, %v907
  %v909 = vpop.f32.mrb[0].mxu0
  %910 = vmatprep.mubr.bf16.mxu0 0
  %911 = vmatmul.mubr.bf16.gmra.mrb[0].mxu0 %v628
  %v912 = vpop.f32.mrb[0].mxu0
  %v913 = vadd.f32 %v864, %v912
  %v914 = vpop.f32.mrb[0].mxu0
  %v915 = vpop.f32.mrb[0].mxu0
  %v916 = vadd.f32 %v867, %v915
  %v917 = vpop.f32.mrb[0].mxu0
  %918 = vdwg.mxu0
  %v919 = vld [vmem:[%s4] sm:$0x1]
  %v920 = vld [vmem:[%s4 + $0x1] sm:$0x1]
  %v921 = vadd.f32 %v905, %v908
  %v922 = vadd.f32 %v921, %v913
  %v923 = vadd.f32 %v922, %v916
  %v924 = vrot.slane %v923, 4
  %v925 = vadd.f32 %v923, %v924
  %v926 = vrot.slane %v925, 2
  %v927 = vadd.f32 %v925, %v926
  %v928 = vrot.slane %v927, 1
  %v929 = vadd.f32 %v927, %v928
  %v930 = vmul.f32 %v905, %v905
  %v931 = vmul.f32 %v908, %v908
  %v932 = vmul.f32 %v913, %v913
  %v933 = vmul.f32 %v916, %v916
  %v934 = vadd.f32 %v930, %v931
  %v935 = vadd.f32 %v934, %v932
  %v936 = vadd.f32 %v935, %v933
  %v937 = vrot.slane %v936, 4
  %v938 = vadd.f32 %v936, %v937
  %v939 = vrot.slane %v938, 2
  %v940 = vadd.f32 %v938, %v939
  %v941 = vrot.slane %v940, 1
  %v942 = vadd.f32 %v940, %v941
  %943 = vmatprep.subr.mxu0 0.0
  %944 = vmatpush1.msra.mxu0 %v28
  %945 = vmatprep.subr.mxu0 0.0
  %946 = vmatpush1.msra.mxu0 %v29
  %947 = vmatprep.subr.mxu0 0.0
  %948 = vmatpush1.msra.mxu0 %v30
  %949 = vmatprep.subr.mxu0 0.0
  %950 = vmatpush1.msra.mxu0 %v31
  %951 = vmatprep.subr.mxu0 0.0
  %952 = vmatpush1.msra.mxu0 %v32
  %953 = vmatprep.subr.mxu0 0.0
  %954 = vmatpush1.msra.mxu0 %v33
  %955 = vmatprep.subr.mxu0 0.0
  %956 = vmatpush1.msra.mxu0 %v34
  %957 = vmatprep.subr.mxu0 0.0
  %958 = vmatpush1.msra.mxu0 %v35
  %959 = vmatprep.subr.mxu0 0.0
  %960 = vmatpush1.msra.mxu0 %v36
  %961 = vmatprep.subr.mxu0 0.0
  %962 = vmatpush1.msra.mxu0 %v37
  %963 = vmatprep.subr.mxu0 0.0
  %964 = vmatpush1.msra.mxu0 %v38
  %965 = vmatprep.subr.mxu0 0.0
  %966 = vmatpush1.msra.mxu0 %v39
  %967 = vmatprep.subr.mxu0 0.0
  %968 = vmatpush1.msra.mxu0 %v40
  %969 = vmatprep.subr.mxu0 0.0
  %970 = vmatpush1.msra.mxu0 %v41
  %971 = vmatprep.subr.mxu0 0.0
  %972 = vmatpush1.msra.mxu0 %v42
  %973 = vmatprep.subr.mxu0 0.0
  %974 = vmatpush1.msra.mxu0 %v43
  %975 = vmatprep.subr.mxu0 0.0
  %976 = vmatpush1.msra.mxu0 0.0
  %977 = vmatprep.subr.mxu0 0.0
  %978 = vmatpush1.msra.mxu0 0.0
  %979 = vmatprep.subr.mxu0 0.0
  %980 = vmatpush1.msra.mxu0 0.0
  %981 = vmatprep.subr.mxu0 0.0
  %982 = vmatpush1.msra.mxu0 0.0
  %983 = vmatprep.subr.mxu0 0.0
  %984 = vmatpush1.msra.mxu0 0.0
  %985 = vmatprep.subr.mxu0 0.0
  %986 = vmatpush1.msra.mxu0 0.0
  %987 = vmatprep.subr.mxu0 0.0
  %988 = vmatpush1.msra.mxu0 0.0
  %989 = vmatprep.subr.mxu0 0.0
  %990 = vmatpush1.msra.mxu0 0.0
  %991 = vmatprep.subr.mxu0 0.0
  %992 = vmatpush1.msra.mxu0 0.0
  %993 = vmatprep.subr.mxu0 0.0
  %994 = vmatpush1.msra.mxu0 0.0
  %995 = vmatprep.subr.mxu0 0.0
  %996 = vmatpush1.msra.mxu0 0.0
  %997 = vmatprep.subr.mxu0 0.0
  %998 = vmatpush1.msra.mxu0 0.0
  %999 = vmatprep.subr.mxu0 0.0
  %1000 = vmatpush1.msra.mxu0 0.0
  %1001 = vmatprep.subr.mxu0 0.0
  %1002 = vmatpush1.msra.mxu0 0.0
  %1003 = vmatprep.subr.mxu0 0.0
  %1004 = vmatpush1.msra.mxu0 0.0
  %1005 = vmatprep.subr.mxu0 0.0
  %1006 = vmatpush1.msra.mxu0 0.0
  %1007 = vmatprep.mubr.f32.mxu0 0.0
  %1008 = vmatmul.mubr.f32.gmra.mrb[0].mxu0 %v929
  %v1009 = vpop.f32.mrb[0].mxu0
  %v1010 = vadd.f32 0.0, %v1009
  %v1011 = vpop.f32.mrb[0].mxu0
  %1012 = vdwg.mxu0
  %1013 = vmatprep.subr.mxu0 0.0
  %1014 = vmatpush1.msra.mxu0 %v28
  %1015 = vmatprep.subr.mxu0 0.0
  %1016 = vmatpush1.msra.mxu0 %v29
  %1017 = vmatprep.subr.mxu0 0.0
  %1018 = vmatpush1.msra.mxu0 %v30
  %1019 = vmatprep.subr.mxu0 0.0
  %1020 = vmatpush1.msra.mxu0 %v31
  %1021 = vmatprep.subr.mxu0 0.0
  %1022 = vmatpush1.msra.mxu0 %v32
  %1023 = vmatprep.subr.mxu0 0.0
  %1024 = vmatpush1.msra.mxu0 %v33
  %1025 = vmatprep.subr.mxu0 0.0
  %1026 = vmatpush1.msra.mxu0 %v34
  %1027 = vmatprep.subr.mxu0 0.0
  %1028 = vmatpush1.msra.mxu0 %v35
  %1029 = vmatprep.subr.mxu0 0.0
  %1030 = vmatpush1.msra.mxu0 %v36
  %1031 = vmatprep.subr.mxu0 0.0
  %1032 = vmatpush1.msra.mxu0 %v37
  %1033 = vmatprep.subr.mxu0 0.0
  %1034 = vmatpush1.msra.mxu0 %v38
  %1035 = vmatprep.subr.mxu0 0.0
  %1036 = vmatpush1.msra.mxu0 %v39
  %1037 = vmatprep.subr.mxu0 0.0
  %1038 = vmatpush1.msra.mxu0 %v40
  %1039 = vmatprep.subr.mxu0 0.0
  %1040 = vmatpush1.msra.mxu0 %v41
  %1041 = vmatprep.subr.mxu0 0.0
  %1042 = vmatpush1.msra.mxu0 %v42
  %1043 = vmatprep.subr.mxu0 0.0
  %1044 = vmatpush1.msra.mxu0 %v43
  %1045 = vmatprep.subr.mxu0 0.0
  %1046 = vmatpush1.msra.mxu0 0.0
  %1047 = vmatprep.subr.mxu0 0.0
  %1048 = vmatpush1.msra.mxu0 0.0
  %1049 = vmatprep.subr.mxu0 0.0
  %1050 = vmatpush1.msra.mxu0 0.0
  %1051 = vmatprep.subr.mxu0 0.0
  %1052 = vmatpush1.msra.mxu0 0.0
  %1053 = vmatprep.subr.mxu0 0.0
  %1054 = vmatpush1.msra.mxu0 0.0
  %1055 = vmatprep.subr.mxu0 0.0
  %1056 = vmatpush1.msra.mxu0 0.0
  %1057 = vmatprep.subr.mxu0 0.0
  %1058 = vmatpush1.msra.mxu0 0.0
  %1059 = vmatprep.subr.mxu0 0.0
  %1060 = vmatpush1.msra.mxu0 0.0
  %1061 = vmatprep.subr.mxu0 0.0
  %1062 = vmatpush1.msra.mxu0 0.0
  %1063 = vmatprep.subr.mxu0 0.0
  %1064 = vmatpush1.msra.mxu0 0.0
  %1065 = vmatprep.subr.mxu0 0.0
  %1066 = vmatpush1.msra.mxu0 0.0
  %1067 = vmatprep.subr.mxu0 0.0
  %1068 = vmatpush1.msra.mxu0 0.0
  %1069 = vmatprep.subr.mxu0 0.0
  %1070 = vmatpush1.msra.mxu0 0.0
  %1071 = vmatprep.subr.mxu0 0.0
  %1072 = vmatpush1.msra.mxu0 0.0
  %1073 = vmatprep.subr.mxu0 0.0
  %1074 = vmatpush1.msra.mxu0 0.0
  %1075 = vmatprep.subr.mxu0 0.0
  %1076 = vmatpush1.msra.mxu0 0.0
  %1077 = vmatprep.mubr.f32.mxu0 0.0
  %1078 = vmatmul.mubr.f32.gmra.mrb[0].mxu0 %v942
  %v1079 = vpop.f32.mrb[0].mxu0
  %v1080 = vadd.f32 0.0, %v1079
  %v1081 = vpop.f32.mrb[0].mxu0
  %1082 = vdwg.mxu0
  %v1083 = vmul.f32 %v1010, %v1010
  %v1084 = vsub.f32 %v1080, %v1083
  %v1085 = vmax.f32 %v1084, 0.0
  %v1086 = vadd.f32 %v1085, 1e-05
  %v1087 = vrsqrt.pop %v1086
  %v1088 = vmul.f32 %v1087, %v919
  %v1089 = vmul.f32 %v1010, %v1088
  %v1090 = vsub.f32 %v920, %v1089
  %v1091 = vlaneseq
  %v1092 = vshrl.u32 %v1091, 7
  %v1093 = vsub.s32 0, %v1092
  %v1094 = vrot.slane %v1088, %v1093
  %v1095 = vmul.f32 %v905, %v1094
  %v1096 = vmul.f32 %v908, %v1094
  %v1097 = vmul.f32 %v913, %v1094
  %v1098 = vmul.f32 %v916, %v1094
  %v1099 = vlaneseq
  %v1100 = vshrl.u32 %v1099, 7
  %v1101 = vsub.s32 0, %v1100
  %v1102 = vrot.slane %v1090, %v1101
  %v1103 = vadd.f32 %v1095, %v1102
  %v1104 = vadd.f32 %v1096, %v1102
  %v1105 = vadd.f32 %v1097, %v1102
  %v1106 = vadd.f32 %v1098, %v1102
  %v1107 = vadd.f32 %v1103, %v24
  %v1108 = vadd.f32 %v1104, %v25
  %v1109 = vadd.f32 %v1105, %v26
  %v1110 = vadd.f32 %v1106, %v27
  %v1111 = vmax.f32 %v1107, 0.0
  %v1112 = vmax.f32 %v1108, 0.0
  %v1113 = vmax.f32 %v1109, 0.0
  %v1114 = vmax.f32 %v1110, 0.0
  %1115 = vst [vmem:[%s6] sm:$0xff] %v1111
  %1116 = vst [vmem:[%s6 + $0x8] sm:$0xff] %v1112
  %1117 = vst [vmem:[%s6 + $0x10] sm:$0xff] %v1113
  %1118 = vst [vmem:[%s6 + $0x18] sm:$0xff] %v1114
  // Predicated region
  $region26: #{resblock_forward.1} parent=0 // pred_check
    _
  $region27: #{resblock_forward.1} parent=0 // pred_check_branch
    %1120 = sbr.rel (0) target = $region29
  $region28: #{resblock_forward.1} parent=0 // pred_region
    _
  $region29: #{resblock_forward.1} parent=0 // pred_fallthru
    _
  // Predicated region
  $region30: #{resblock_forward.1} parent=0 // pred_check
    _
  $region31: #{resblock_forward.1} parent=0 // pred_check_branch
    %1122 = sbr.rel (0) target = $region33
  $region32: #{resblock_forward.1} parent=0 // pred_region
    _
  $region33: #{resblock_forward.1} parent=0 // pred_fallthru
    _

</llo_original>
